<compile_context>
chip_gen: v5e
topology: v5e:2x2
jax: 0.10.0
libtpu: 0.0.40
codegen_flags: <defaults>
</compile_context>

<pallas_src>
import numpy as np
import jax
import jax.numpy as jnp
from jax.experimental import pallas as pl
from jax.experimental.pallas import tpu as pltpu

_F32_TINY = float(np.finfo(np.float32).tiny)


# ----------------------------------------------------------------------------
# STFT basis construction (mirrors STFT.__init__)
# ----------------------------------------------------------------------------
def hann_periodic(n):
    k = np.arange(n, dtype=np.float64)
    return 0.5 - 0.5 * np.cos(2.0 * np.pi * k / n)


def make_stft_bases(filter_length, hop_length, win_length):
    L = filter_length
    cutoff = L // 2 + 1
    fb = np.fft.fft(np.eye(L))                                    # fb[k, n] = exp(-2πi k n / L)
    fourier_basis = np.vstack([np.real(fb[:cutoff]), np.imag(fb[:cutoff])])  # (2C, L)
    scale = float(L) / hop_length
    inverse_basis = np.linalg.pinv(scale * fourier_basis).T       # (2C, L)
    win = hann_periodic(win_length)
    assert win_length == L, "pad_center is a no-op only when win_length == filter_length"
    forward_basis = fourier_basis * win[None, :]
    inverse_basis = inverse_basis * win[None, :]
    C = cutoff
    fwd_r = forward_basis[:C].astype(np.float32)                  # (C, L)
    fwd_i = forward_basis[C:].astype(np.float32)                  # (C, L)
    inv_r = inverse_basis[:C].astype(np.float32)                  # (C, L)
    inv_i = inverse_basis[C:].astype(np.float32)                  # (C, L)
    win_sq = (win ** 2).astype(np.float32)                        # (L,)
    return fwd_r, fwd_i, inv_r, inv_i, win_sq


def _round_up(x, m):
    return ((x + m - 1) // m) * m


def make_packed_bases(fwd_r, fwd_i, inv_r, inv_i):
    """Pack C = L//2+1 bins into Cp = round_up(C-1, 128) lanes per section.

    Exploits imag(DC) == 0 (exact) and imag(Nyquist) ≈ 0 (numerically ~1e-16,
    and its inverse-path contribution is multiplied by that ~0 coefficient in
    the reference), so only real[0..C-1] and imag[1..C-2] need MXU columns:
      * real section, lanes 0..C-2      : real basis of bins 0..C-2
      * aux  section, lane  0           : real basis of the Nyquist bin
      * aux  section, lanes 1..C-2      : imag basis of bins 1..C-2
    """
    C, L = fwd_r.shape
    Cm = C - 1
    Cp = max(128, _round_up(Cm, 128))

    fwd_cat = np.zeros((L, 2 * Cp), np.float32)
    fwd_cat[:, :Cm] = fwd_r[:Cm].T
    fwd_cat[:, Cp] = fwd_r[Cm]                                    # Nyquist real -> aux lane 0
    fwd_cat[:, Cp + 1:Cp + Cm] = fwd_i[1:Cm].T

    inv_top = np.zeros((Cp, L), np.float32)                       # real-section inverse basis
    inv_top[:Cm] = inv_r[:Cm]
    inv_bot = np.zeros((Cp, L), np.float32)                       # aux-section inverse basis
    inv_bot[0] = inv_r[Cm]                                        # Nyquist real
    inv_bot[1:Cm] = inv_i[1:Cm]
    return jnp.asarray(fwd_cat), jnp.asarray(inv_top), jnp.asarray(inv_bot), Cp


# ----------------------------------------------------------------------------
# Framing glue (torch F.pad(mode='reflect') + strided conv windowing)
# ----------------------------------------------------------------------------
def reflect_pad(audio, p):
    left = audio[:, 1:p + 1][:, ::-1]
    right = audio[:, -p - 1:-1][:, ::-1]
    return jnp.concatenate([left, audio, right], axis=1)


def frame_signal(audio, L, hop):
    padded = reflect_pad(audio, L // 2)
    t_padded = padded.shape[1]
    n_frames = (t_padded - L) // hop + 1
    idx = np.arange(n_frames)[:, None] * hop + np.arange(L)[None, :]
    return padded[:, idx]                                         # (B, n_frames, L)


# ----------------------------------------------------------------------------
# Pallas kernel: forward STFT -> denoise -> inverse STFT (per-frame part)
# ----------------------------------------------------------------------------
def _make_denoiser_kernel(Cp, compute_dtype):
    def kernel(frames_ref, fwd_ref, inv_top_ref, inv_bot_ref, bias_ref, out_ref):
        frames = frames_ref[0]                                    # (TNF, L) compute_dtype
        # Fused forward DFT: one MXU pass, f32 accumulation.
        spec = jnp.dot(frames, fwd_ref[...],
                       preferred_element_type=jnp.float32)        # (TNF, 2Cp) f32
        a = spec[:, :Cp]                # real of bins 0..C-2
        b = spec[:, Cp:]                # lane 0: Nyquist real; lanes >=1: imag bins 1..C-2

        lane = jax.lax.broadcasted_iota(jnp.int32, (1, Cp), 1)
        is0 = lane == 0
        bias_main = bias_ref[:, :Cp]                              # (1, Cp)
        bias_ny = bias_ref[:, Cp:Cp + 1]                          # (1, 1)

        # Bins 0..C-2: one EUP rsqrt replaces sqrt + two divides; tiny floor
        # keeps padded / zero lanes finite (bias >= 0, so mag==0 -> scale==0,
        # matching torch's atan2 path).
        b_im = jnp.where(is0, 0.0, b)
        sq = a * a + b_im * b_im
        inv_mag = jax.lax.rsqrt(jnp.maximum(sq, _F32_TINY))
        scale = jnp.maximum(sq * inv_mag - bias_main, 0.0) * inv_mag   # (TNF, Cp)

        # Nyquist bin: single lane column, negligible VPU/EUP cost.
        ny = b[:, :1]                                             # (TNF, 1)
        sq_ny = ny * ny
        inv_ny = jax.lax.rsqrt(jnp.maximum(sq_ny, _F32_TINY))
        scale_ny = jnp.maximum(sq_ny * inv_ny - bias_ny, 0.0) * inv_ny  # (TNF, 1)

        rec_a = (a * scale).astype(compute_dtype)
        rec_b = jnp.where(is0, b * scale_ny, b * scale).astype(compute_dtype)

        # Inverse DFT as two accumulating MXU dots (no (TNF, 2Cp) concat copy).
        out = jnp.dot(rec_a, inv_top_ref[...], preferred_element_type=jnp.float32)
        out = out + jnp.dot(rec_b, inv_bot_ref[...], preferred_element_type=jnp.float32)
        out_ref[0] = out
    return kernel


def _invariant_spec(block_shape):
    """Grid-invariant operand: single-buffer it (constant index_map)."""
    idx = lambda b, n: (0, 0)
    try:
        return pl.BlockSpec(block_shape, idx, pipeline_mode=pl.Buffered(1))
    except TypeError:                                             # older jax: no pipeline_mode
        return pl.BlockSpec(block_shape, idx)


def _pick_tile_nf():
    # v5e/v6e: 128 MiB VMEM -> bigger tiles amortize per-step overhead and match
    # the MXU cadence; v7x: 64 MiB per-TC -> smaller tiles keep both TCs fed.
    try:
        vmem_cap = pltpu.get_tpu_info().vmem_capacity_bytes
    except Exception:
        return 256
    return 512 if vmem_cap >= (96 << 20) else 256


def denoiser_frames_pallas(frames, fwd_cat, inv_top, inv_bot, Cp, bias_spec,
                           strength, tile_nf=None, use_bf16=True):
    """frames: (B, NF, L) f32 -> denoised frames (B, NF, L) f32."""
    B, NF, L = frames.shape
    C = bias_spec.shape[0]
    Cm = C - 1
    compute_dtype = jnp.bfloat16 if use_bf16 else jnp.float32
    bpe = 2 if use_bf16 else 4

    if tile_nf is None:
        tile_nf = _pick_tile_nf()
    tile_nf = max(8, (int(tile_nf) // 8) * 8)

    # Fold strength into the bias on the host; Nyquist bias rides in aux lane 0.
    bias_scaled = jnp.asarray(bias_spec, jnp.float32) * jnp.float32(strength)
    bias_p = jnp.zeros((1, 2 * Cp), jnp.float32)
    bias_p = bias_p.at[0, :Cm].set(bias_scaled[:Cm])
    bias_p = bias_p.at[0, Cp].set(bias_scaled[Cm])

    frames = frames.astype(compute_dtype)
    fwd_cat = fwd_cat.astype(compute_dtype)
    inv_top = inv_top.astype(compute_dtype)
    inv_bot = inv_bot.astype(compute_dtype)

    # Frame-axis tiling: pad NF (zero frames -> zero output frames, cropped after).
    nf_padded = _round_up(NF, tile_nf)
    if nf_padded != NF:
        frames = jnp.pad(frames, ((0, 0), (0, nf_padded - NF), (0, 0)))
    grid = (B, nf_padded // tile_nf)

    # VMEM budget: frame/out tiles double-buffered, bases/bias single-buffered,
    # f32 elementwise temporaries, 25% margin.  Clamped to [16, 64] MiB so it
    # stays valid on v7x (64 MiB/TC) while overriding v5e's 16 MiB default.
    vmem = 2 * (tile_nf * L * bpe + tile_nf * L * 4)
    vmem += (L * 2 * Cp + 2 * Cp * L) * bpe + 2 * Cp * 4
    vmem += tile_nf * 2 * Cp * 4 + 8 * tile_nf * Cp * 4 + 2 * tile_nf * L * 4
    vmem = int(vmem * 1.25) + (2 << 20)
    vmem = min(max(vmem, 16 << 20), 64 << 20)

    flops = 8 * Cp * L * B * nf_padded                            # fwd + 2 inv dots
    bytes_accessed = (B * nf_padded * L * (bpe + 4)
                      + (L * 2 * Cp + 2 * Cp * L) * bpe + 2 * Cp * 4)

    out = pl.pallas_call(
        _make_denoiser_kernel(Cp, compute_dtype),
        out_shape=jax.ShapeDtypeStruct((B, nf_padded, L), jnp.float32),
        grid=grid,
        in_specs=[
            pl.BlockSpec((1, tile_nf, L), lambda b, n: (b, n, 0)),   # frames tile
            _invariant_spec((L, 2 * Cp)),                            # packed fwd basis
            _invariant_spec((Cp, L)),                                # inv basis (real section)
            _invariant_spec((Cp, L)),                                # inv basis (aux section)
            _invariant_spec((1, 2 * Cp)),                            # bias * strength
        ],
        out_specs=pl.BlockSpec((1, tile_nf, L), lambda b, n: (b, n, 0)),
        compiler_params=pltpu.CompilerParams(
            dimension_semantics=("parallel", "parallel"),
            vmem_limit_bytes=vmem),
        cost_estimate=pl.CostEstimate(
            flops=flops,
            transcendentals=B * nf_padded * (Cp + 1),
            bytes_accessed=bytes_accessed),
    )(frames, fwd_cat, inv_top, inv_bot, bias_p)
    return out[:, :NF, :]


# ----------------------------------------------------------------------------
# Inverse-STFT post-processing glue (overlap-add, window_sumsquare, crop)
# ----------------------------------------------------------------------------
def istft_postprocess(frames_out, win_sq_np, L, hop):
    B, NF, _ = frames_out.shape
    out_len = L + hop * (NF - 1)
    n_overlap = L // hop

    # window_sumsquare is input-independent -> compute in numpy at trace time.
    ws = np.zeros((out_len,), np.float32)
    for j in range(n_overlap):
        ws[j * hop: j * hop + NF * hop] += np.tile(win_sq_np[j * hop:(j + 1) * hop], NF)
    inv_ws = np.where(ws > _F32_TINY, 1.0 / np.maximum(ws, _F32_TINY), 1.0).astype(np.float32)

    y = jnp.zeros((B, out_len), jnp.float32)
    for j in range(n_overlap):                                    # n_overlap shifted adds
        seg = frames_out[:, :, j * hop:(j + 1) * hop].reshape(B, NF * hop)
        y = y.at[:, j * hop: j * hop + NF * hop].add(seg)
    y = y * jnp.asarray(inv_ws)[None, :]
    y = y * (float(L) / hop)
    y = y[:, L // 2: out_len - L // 2]
    return y[:, None, :]                                          # (B, 1, T) as in torch


# ----------------------------------------------------------------------------
# Full forward pass + pure-JAX reference
# ----------------------------------------------------------------------------
def denoiser_forward(audio, fwd_cat, inv_top, inv_bot, Cp, win_sq, bias_spec,
                     L, hop, strength=0.1, tile_nf=None, use_bf16=True):
    frames = frame_signal(audio.astype(jnp.float32), L, hop)
    frames_out = denoiser_frames_pallas(frames, fwd_cat, inv_top, inv_bot, Cp,
                                        bias_spec, strength, tile_nf=tile_nf,
                                        use_bf16=use_bf16)
    return istft_postprocess(frames_out, win_sq, L, hop)


def denoiser_reference(audio, fwd_r, fwd_i, inv_r, inv_i, win_sq, bias_spec, L, hop,
                       strength=0.1):
    hp = jax.lax.Precision.HIGHEST
    frames = frame_signal(audio.astype(jnp.float32), L, hop)
    real = jnp.einsum('bnl,cl->bnc', frames, jnp.asarray(fwd_r), precision=hp)
    imag = jnp.einsum('bnl,cl->bnc', frames, jnp.asarray(fwd_i), precision=hp)
    mag = jnp.sqrt(real * real + imag * imag)
    mag_d = jnp.maximum(mag - jnp.asarray(bias_spec)[None, None, :] * strength, 0.0)
    nz = mag > 0.0
    cosp = jnp.where(nz, real / jnp.where(nz, mag, 1.0), 1.0)
    sinp = jnp.where(nz, imag / jnp.where(nz, mag, 1.0), 0.0)
    frames_out = (jnp.einsum('bnc,cl->bnl', mag_d * cosp, jnp.asarray(inv_r), precision=hp)
                  + jnp.einsum('bnc,cl->bnl', mag_d * sinp, jnp.asarray(inv_i), precision=hp))
    return istft_postprocess(frames_out, win_sq, L, hop)


def compute_bias_spec(bias_audio, fwd_r, fwd_i, L, hop):
    """Mirrors Denoiser.__init__: bias_spec = |STFT(bias_audio)|[:, :, 0]."""
    hp = jax.lax.Precision.HIGHEST
    frames = frame_signal(bias_audio.astype(jnp.float32), L, hop)
    real = jnp.einsum('bnl,cl->bnc', frames, jnp.asarray(fwd_r), precision=hp)
    imag = jnp.einsum('bnl,cl->bnc', frames, jnp.asarray(fwd_i), precision=hp)
    mag = jnp.sqrt(real * real + imag * imag)
    return mag[0, 0, :]                                           # (C,)


# ----------------------------------------------------------------------------
if __name__ == "__main__":
    # Small-but-consistent STFT configuration (module default is 1024/4/1024).
    # tile_nf is forced small here so the toy run exercises a multi-tile grid.
    filter_length, n_overlap = 64, 4
    hop_length = filter_length // n_overlap
    win_length = filter_length
    B, T = 2, 256
    T_bias = 128
    strength = 0.1
    tile_nf = 8

    fwd_r, fwd_i, inv_r, inv_i, win_sq = make_stft_bases(filter_length, hop_length, win_length)
    fwd_cat, inv_top, inv_bot, Cp = make_packed_bases(fwd_r, fwd_i, inv_r, inv_i)

    key = jax.random.PRNGKey(0)
    k_audio, k_bias = jax.random.split(key)
    audio = jax.random.normal(k_audio, (B, T), dtype=jnp.float32)
    # TODO(synk): the real Denoiser derives bias_audio = hifigan(zeros-mel); no vocoder
    # is available here, so a deterministic pseudo "bias audio" stands in for it.
    bias_audio = 0.01 * jax.random.normal(k_bias, (1, T_bias), dtype=jnp.float32)
    bias_spec = compute_bias_spec(bias_audio, fwd_r, fwd_i, filter_length, hop_length)

    ref = denoiser_reference(audio, fwd_r, fwd_i, inv_r, inv_i, win_sq, bias_spec,
                             filter_length, hop_length, strength=strength)
    ref = jax.block_until_ready(ref)

    # f32-operand run: validates the bin-packing / kernel structure tightly.
    out_f32 = denoiser_forward(audio, fwd_cat, inv_top, inv_bot, Cp, win_sq, bias_spec,
                               filter_length, hop_length, strength=strength,
                               tile_nf=tile_nf, use_bf16=False)
    out_f32 = jax.block_until_ready(out_f32)

    # bf16-operand run (production fast path): looser tolerance vs f32 reference.
    out_bf16 = denoiser_forward(audio, fwd_cat, inv_top, inv_bot, Cp, win_sq, bias_spec,
                                filter_length, hop_length, strength=strength,
                                tile_nf=tile_nf, use_bf16=True)
    out_bf16 = jax.block_until_ready(out_bf16)

    assert out_f32.shape == (B, 1, T), out_f32.shape
    assert out_bf16.shape == (B, 1, T), out_bf16.shape
    assert bool(jnp.all(jnp.isfinite(out_f32)))
    assert bool(jnp.all(jnp.isfinite(out_bf16)))
    np.testing.assert_allclose(np.asarray(out_f32), np.asarray(ref), rtol=2e-2, atol=2e-2)
    np.testing.assert_allclose(np.asarray(out_bf16), np.asarray(ref), rtol=5e-2, atol=5e-2)
    print("KERNEL_OK")
</pallas_src>

<mosaic_0001>
module attributes {stable_mosaic.version = 11 : i64} {
  func.func @kernel(%arg0: i32, %arg1: i32, %arg2: memref<1x8x64xf32, #tpu.memory_space<vmem>>, %arg3: memref<64x256xf32, #tpu.memory_space<vmem>>, %arg4: memref<128x64xf32, #tpu.memory_space<vmem>>, %arg5: memref<128x64xf32, #tpu.memory_space<vmem>>, %arg6: memref<1x256xf32, #tpu.memory_space<vmem>>, %arg7: memref<1x8x64xf32, #tpu.memory_space<vmem>>) attributes {dimension_semantics = [#tpu.dimension_semantics<parallel>, #tpu.dimension_semantics<parallel>], iteration_bounds = array<i64: 2, 3>, scalar_prefetch = 0 : i64, scratch_operands = 0 : i64, tpu.core_type = #tpu.core_type<tc>, window_params = [{transform_indices = @transform_0, window_bounds = array<i64: 1, 8, 64>}, {pipeline_mode = #tpu.pipeline_mode<synchronous>, transform_indices = @transform_1, window_bounds = array<i64: 64, 256>}, {pipeline_mode = #tpu.pipeline_mode<synchronous>, transform_indices = @transform_2, window_bounds = array<i64: 128, 64>}, {pipeline_mode = #tpu.pipeline_mode<synchronous>, transform_indices = @transform_3, window_bounds = array<i64: 128, 64>}, {pipeline_mode = #tpu.pipeline_mode<synchronous>, transform_indices = @transform_4, window_bounds = array<i64: 1, 256>}, {transform_indices = @transform_5, window_bounds = array<i64: 1, 8, 64>}]} {
    %c0 = arith.constant 0 : index
    %c0_0 = arith.constant 0 : index
    %c0_1 = arith.constant 0 : index
    %0 = vector.load %arg2[%c0, %c0_0, %c0_1] : memref<1x8x64xf32, #tpu.memory_space<vmem>>, vector<1x8x64xf32>
    %1 = vector.shape_cast %0 : vector<1x8x64xf32> to vector<8x64xf32>
    %c0_2 = arith.constant 0 : index
    %c0_3 = arith.constant 0 : index
    %2 = vector.load %arg3[%c0_2, %c0_3] : memref<64x256xf32, #tpu.memory_space<vmem>>, vector<64x256xf32>
    %cst = arith.constant dense<0.000000e+00> : vector<8x256xf32>
    %3 = tpu.matmul %1, %2, %cst {dimension_numbers = #tpu.dot_dimension_numbers<[1], [0], [0], [1], [0, 0, 1, 1], [], []>} : vector<8x64xf32>, vector<64x256xf32>, vector<8x256xf32> -> vector<8x256xf32>
    %4 = vector.extract_strided_slice %3 {offsets = [0, 0], sizes = [8, 128], strides = [1, 1]} : vector<8x256xf32> to vector<8x128xf32>
    %5 = vector.extract_strided_slice %3 {offsets = [0, 128], sizes = [8, 128], strides = [1, 1]} : vector<8x256xf32> to vector<8x128xf32>
    %6 = tpu.iota {dimensions = array<i32: 1>} : vector<1x128xi32>
    %c0_i32 = arith.constant 0 : i32
    %7 = vector.broadcast %c0_i32 : i32 to vector<1x128xi32>
    %8 = arith.cmpi eq, %6, %7 : vector<1x128xi32>
    %c0_4 = arith.constant 0 : index
    %c0_5 = arith.constant 0 : index
    %9 = vector.load %arg6[%c0_4, %c0_5] : memref<1x256xf32, #tpu.memory_space<vmem>>, vector<1x128xf32>
    %c0_6 = arith.constant 0 : index
    %c128 = arith.constant 128 : index
    %10 = vector.load %arg6[%c0_6, %c128] : memref<1x256xf32, #tpu.memory_space<vmem>>, vector<1x1xf32>
    %cst_7 = arith.constant 0.000000e+00 : f32
    %11 = vector.shape_cast %8 : vector<1x128xi1> to vector<1x128xi1>
    %12 = vector.broadcast %11 : vector<1x128xi1> to vector<8x128xi1>
    %13 = vector.broadcast %cst_7 : f32 to vector<8x128xf32>
    %14 = arith.select %12, %13, %5 : vector<8x128xi1>, vector<8x128xf32>
    %15 = arith.mulf %4, %4 : vector<8x128xf32>
    %16 = arith.mulf %14, %14 : vector<8x128xf32>
    %17 = arith.addf %15, %16 : vector<8x128xf32>
    %cst_8 = arith.constant 1.17549435E-38 : f32
    %18 = vector.broadcast %cst_8 : f32 to vector<8x128xf32>
    %19 = arith.maximumf %17, %18 : vector<8x128xf32>
    %20 = math.rsqrt %19 : vector<8x128xf32>
    %21 = arith.mulf %17, %20 : vector<8x128xf32>
    %22 = vector.broadcast %9 : vector<1x128xf32> to vector<8x128xf32>
    %23 = arith.subf %21, %22 : vector<8x128xf32>
    %cst_9 = arith.constant 0.000000e+00 : f32
    %24 = vector.broadcast %cst_9 : f32 to vector<8x128xf32>
    %25 = arith.maximumf %23, %24 : vector<8x128xf32>
    %26 = arith.mulf %25, %20 : vector<8x128xf32>
    %27 = vector.extract_strided_slice %5 {offsets = [0, 0], sizes = [8, 1], strides = [1, 1]} : vector<8x128xf32> to vector<8x1xf32>
    %28 = arith.mulf %27, %27 : vector<8x1xf32>
    %cst_10 = arith.constant 1.17549435E-38 : f32
    %29 = vector.broadcast %cst_10 : f32 to vector<8x1xf32>
    %30 = arith.maximumf %28, %29 : vector<8x1xf32>
    %31 = math.rsqrt %30 : vector<8x1xf32>
    %32 = arith.mulf %28, %31 : vector<8x1xf32>
    %33 = vector.broadcast %10 : vector<1x1xf32> to vector<8x1xf32>
    %34 = arith.subf %32, %33 : vector<8x1xf32>
    %cst_11 = arith.constant 0.000000e+00 : f32
    %35 = vector.broadcast %cst_11 : f32 to vector<8x1xf32>
    %36 = arith.maximumf %34, %35 : vector<8x1xf32>
    %37 = arith.mulf %36, %31 : vector<8x1xf32>
    %38 = arith.mulf %4, %26 : vector<8x128xf32>
    %39 = vector.broadcast %37 : vector<8x1xf32> to vector<8x128xf32>
    %40 = arith.mulf %5, %39 : vector<8x128xf32>
    %41 = arith.mulf %5, %26 : vector<8x128xf32>
    %42 = vector.shape_cast %8 : vector<1x128xi1> to vector<1x128xi1>
    %43 = vector.broadcast %42 : vector<1x128xi1> to vector<8x128xi1>
    %44 = arith.select %43, %40, %41 : vector<8x128xi1>, vector<8x128xf32>
    %c0_12 = arith.constant 0 : index
    %c0_13 = arith.constant 0 : index
    %45 = vector.load %arg4[%c0_12, %c0_13] : memref<128x64xf32, #tpu.memory_space<vmem>>, vector<128x64xf32>
    %cst_14 = arith.constant dense<0.000000e+00> : vector<8x64xf32>
    %46 = tpu.matmul %38, %45, %cst_14 {dimension_numbers = #tpu.dot_dimension_numbers<[1], [0], [0], [1], [0, 0, 1, 1], [], []>} : vector<8x128xf32>, vector<128x64xf32>, vector<8x64xf32> -> vector<8x64xf32>
    %c0_15 = arith.constant 0 : index
    %c0_16 = arith.constant 0 : index
    %47 = vector.load %arg5[%c0_15, %c0_16] : memref<128x64xf32, #tpu.memory_space<vmem>>, vector<128x64xf32>
    %cst_17 = arith.constant dense<0.000000e+00> : vector<8x64xf32>
    %48 = tpu.matmul %44, %47, %cst_17 {dimension_numbers = #tpu.dot_dimension_numbers<[1], [0], [0], [1], [0, 0, 1, 1], [], []>} : vector<8x128xf32>, vector<128x64xf32>, vector<8x64xf32> -> vector<8x64xf32>
    %49 = arith.addf %46, %48 : vector<8x64xf32>
    %c0_18 = arith.constant 0 : index
    %c0_19 = arith.constant 0 : index
    %c0_20 = arith.constant 0 : index
    %50 = vector.load %arg7[%c0_18, %c0_19, %c0_20] : memref<1x8x64xf32, #tpu.memory_space<vmem>>, vector<1x8x64xf32>
    %51 = vector.shape_cast %50 : vector<1x8x64xf32> to vector<8x64xf32>
    %52 = vector.shape_cast %49 : vector<8x64xf32> to vector<1x8x64xf32>
    tpu.vector_store %arg7[%c0_18, %c0_19, %c0_20], %52 {strides = array<i32>} : memref<1x8x64xf32, #tpu.memory_space<vmem>>, vector<1x8x64xf32>,
    return
  }
  func.func @transform_0(%arg0: i32, %arg1: i32) -> (i32, i32, i32) {
    %c0_i32 = arith.constant 0 : i32
    %c0_i32_0 = arith.constant 0 : i32
    return %arg0, %arg1, %c0_i32 : i32, i32, i32
  }
  func.func @transform_1(%arg0: i32, %arg1: i32) -> (i32, i32) {
    %c0_i32 = arith.constant 0 : i32
    %c0_i32_0 = arith.constant 0 : i32
    %c0_i32_1 = arith.constant 0 : i32
    return %c0_i32, %c0_i32_0 : i32, i32
  }
  func.func @transform_2(%arg0: i32, %arg1: i32) -> (i32, i32) {
    %c0_i32 = arith.constant 0 : i32
    %c0_i32_0 = arith.constant 0 : i32
    %c0_i32_1 = arith.constant 0 : i32
    return %c0_i32, %c0_i32_0 : i32, i32
  }
  func.func @transform_3(%arg0: i32, %arg1: i32) -> (i32, i32) {
    %c0_i32 = arith.constant 0 : i32
    %c0_i32_0 = arith.constant 0 : i32
    %c0_i32_1 = arith.constant 0 : i32
    return %c0_i32, %c0_i32_0 : i32, i32
  }
  func.func @transform_4(%arg0: i32, %arg1: i32) -> (i32, i32) {
    %c0_i32 = arith.constant 0 : i32
    %c0_i32_0 = arith.constant 0 : i32
    %c0_i32_1 = arith.constant 0 : i32
    return %c0_i32, %c0_i32_0 : i32, i32
  }
  func.func @transform_5(%arg0: i32, %arg1: i32) -> (i32, i32, i32) {
    %c0_i32 = arith.constant 0 : i32
    %c0_i32_0 = arith.constant 0 : i32
    return %arg0, %arg1, %c0_i32 : i32, i32, i32
  }
}

</mosaic_0001>

<llo_original>
// kernel: tpu_custom_call.1
$region0: #{tpu_custom_call.1}
  #allocation0 [shape = 'u32[]', space=smem, size = 0x4, offset = 0x4, fixed_abs, tag = 'smem constant byte address 0x4 - core index']
  #allocation1 [shape = 'u32[72,128]{1,0:T(1,128)}', space=vmem, size = 0x9000, scoped, tag = 'internal scratch']
  %s0 = inlined_call_operand.vmem [shape: f32[2,24,64], index: 0, kind: input, shape index: {}]
  %s1 = inlined_call_operand.vmem [shape: f32[64,256], index: 1, kind: input, shape index: {}]
  %s2 = inlined_call_operand.vmem [shape: f32[128,64], index: 2, kind: input, shape index: {}]
  %s3 = inlined_call_operand.vmem [shape: f32[128,64], index: 3, kind: input, shape index: {}]
  %s4 = inlined_call_operand.vmem [shape: f32[1,256], index: 4, kind: input, shape index: {}]
  %s5 = inlined_call_operand.hbm [shape: f32[2,24,64], index: 5, kind: output, shape index: {}]
  %s6 = sld [smem:[#allocation0]]
  $region53: #{tpu_custom_call.1} parent=0
    _
  %s8 = ssub.s32 1, %s6
  %s9 = scalar_select 0, %s8, %s6
  $region1: #{tpu_custom_call.1} parent=0
    #allocation2 [shape = 'u8[8192]{0}', space=vmem, size = 0x2000, scoped, tag = 'output window, operand 0']
    #allocation3 [shape = 's32[2]{0}', space=sflag, size = 0x8, scoped, tag = 'scoped memory for tpu_custom_call.1']
    %10 = vsyncpa [#allocation3], 0
    %s11 = scalar_lea.sflag [#allocation3], 1
    %12 = vsyncpa %s11, 0
    loop: start=0, step=1, limit=8
    $region2: #{tpu_custom_call.1} parent=1 // loop_pre_header
      _
    $region3: #{tpu_custom_call.1} parent=1 // loop_header
      %s14 = sphi 0, %s18
      %p15 = scmp.ge.s32.totalorder %s14, 8
      %s21 = sphi 0, %s33
      %s22 = sphi 0, %s29
      %s23 = sphi 0, %s21
      %s24 = sphi 0, %s22
      %s25 = sphi 0, %s23
      %s26 = sphi 0, %s24
      %s38 = sphi 0, %s40
      %s41 = sphi 0, %s38
      %s42 = sphi 0, %s41
      %s58 = sphi 0, %s42
      %s62 = sphi 0, %s62
      %s64 = sphi 0, %s62
      %s65 = sphi 0, %s64
      %s79 = sphi 0, %s65
      %s83 = sphi 0, %s83
      %s85 = sphi 0, %s83
      %s86 = sphi 0, %s85
      %s100 = sphi 0, %s86
      %s104 = sphi 0, %s104
      %s106 = sphi 0, %s104
      %s107 = sphi 0, %s106
      %s121 = sphi 0, %s107
      %s125 = sphi 0, %s125
      %s127 = sphi 0, %s125
      %s128 = sphi 0, %s127
      %s142 = sphi 0, %s128
      %s150 = sphi 0, %s152
      %s153 = sphi 0, %s150
      %s154 = sphi 0, %s153
      %s170 = sphi 0, %s154
    $region4: #{tpu_custom_call.1} parent=1 // loop_header_branch
      %17 = sbr.rel (%p15) target = $region8
    $region5: #{tpu_custom_call.1} parent=1 // loop_body
      %s19 = ssub.s32 %s14, 1
      %s20 = ssub.s32 %s14, 2
      %s27 = sadd.s32 1, %s22
      %p28 = scmp.ge.s32.totalorder %s27, 3
      %s29 = scalar_select %p28, 0, %s27
      %s30 = sadd.s32 1, %s21
      %s31 = scalar_select %p28, %s30, %s21
      %p32 = scmp.ge.s32.totalorder %s31, 2
      %s33 = scalar_select %p32, 0, %s31
      %s34 = ssub.s32 %s21, %s33
      %s35 = ssub.s32 %s22, %s29
      %s36 = sor.u32 %s34, %s35
      %p37 = scmp.eq.s32.totalorder %s36, 0
      %s39 = sadd.s32 %s38, 1
      %s40 = scalar_select %p37, %s38, %s39
      %p43 = pneg %p37
      %p44 = scmp.eq.s32.totalorder %s14, 5
      %p45 = por %p43, %p44
      %p46 = scmp.ne.s32.totalorder %s38, %s41
      %p47 = scmp.eq.s32.totalorder %s14, 0
      %p48 = por %p46, %p47
      %p49 = scmp.ne.s32.totalorder %s38, %s41
      %p50 = scmp.eq.s32.totalorder %s19, 5
      %p51 = por %p49, %p50
      %p52 = scmp.ne.s32.totalorder %s41, %s42
      %p53 = scmp.eq.s32.totalorder %s19, 0
      %p54 = por %p52, %p53
      %p55 = scmp.ne.s32.totalorder %s41, %s42
      %p56 = scmp.eq.s32.totalorder %s20, 5
      %p57 = por %p55, %p56
      %p59 = scmp.ne.s32.totalorder %s42, %s58
      %p60 = scmp.eq.s32.totalorder %s20, 0
      %p61 = por %p59, %p60
      %s63 = sadd.s32 %s62, 1
      %p66 = scmp.eq.s32.totalorder %s14, 5
      %p67 = scmp.ne.s32.totalorder %s62, %s64
      %p68 = scmp.eq.s32.totalorder %s14, 0
      %p69 = por %p67, %p68
      %p70 = scmp.ne.s32.totalorder %s62, %s64
      %p71 = scmp.eq.s32.totalorder %s19, 5
      %p72 = por %p70, %p71
      %p73 = scmp.ne.s32.totalorder %s64, %s65
      %p74 = scmp.eq.s32.totalorder %s19, 0
      %p75 = por %p73, %p74
      %p76 = scmp.ne.s32.totalorder %s64, %s65
      %p77 = scmp.eq.s32.totalorder %s20, 5
      %p78 = por %p76, %p77
      %p80 = scmp.ne.s32.totalorder %s65, %s79
      %p81 = scmp.eq.s32.totalorder %s20, 0
      %p82 = por %p80, %p81
      %s84 = sadd.s32 %s83, 1
      %p87 = scmp.eq.s32.totalorder %s14, 5
      %p88 = scmp.ne.s32.totalorder %s83, %s85
      %p89 = scmp.eq.s32.totalorder %s14, 0
      %p90 = por %p88, %p89
      %p91 = scmp.ne.s32.totalorder %s83, %s85
      %p92 = scmp.eq.s32.totalorder %s19, 5
      %p93 = por %p91, %p92
      %p94 = scmp.ne.s32.totalorder %s85, %s86
      %p95 = scmp.eq.s32.totalorder %s19, 0
      %p96 = por %p94, %p95
      %p97 = scmp.ne.s32.totalorder %s85, %s86
      %p98 = scmp.eq.s32.totalorder %s20, 5
      %p99 = por %p97, %p98
      %p101 = scmp.ne.s32.totalorder %s86, %s100
      %p102 = scmp.eq.s32.totalorder %s20, 0
      %p103 = por %p101, %p102
      %s105 = sadd.s32 %s104, 1
      %p108 = scmp.eq.s32.totalorder %s14, 5
      %p109 = scmp.ne.s32.totalorder %s104, %s106
      %p110 = scmp.eq.s32.totalorder %s14, 0
      %p111 = por %p109, %p110
      %p112 = scmp.ne.s32.totalorder %s104, %s106
      %p113 = scmp.eq.s32.totalorder %s19, 5
      %p114 = por %p112, %p113
      %p115 = scmp.ne.s32.totalorder %s106, %s107
      %p116 = scmp.eq.s32.totalorder %s19, 0
      %p117 = por %p115, %p116
      %p118 = scmp.ne.s32.totalorder %s106, %s107
      %p119 = scmp.eq.s32.totalorder %s20, 5
      %p120 = por %p118, %p119
      %p122 = scmp.ne.s32.totalorder %s107, %s121
      %p123 = scmp.eq.s32.totalorder %s20, 0
      %p124 = por %p122, %p123
      %s126 = sadd.s32 %s125, 1
      %p129 = scmp.eq.s32.totalorder %s14, 5
      %p130 = scmp.ne.s32.totalorder %s125, %s127
      %p131 = scmp.eq.s32.totalorder %s14, 0
      %p132 = por %p130, %p131
      %p133 = scmp.ne.s32.totalorder %s125, %s127
      %p134 = scmp.eq.s32.totalorder %s19, 5
      %p135 = por %p133, %p134
      %p136 = scmp.ne.s32.totalorder %s127, %s128
      %p137 = scmp.eq.s32.totalorder %s19, 0
      %p138 = por %p136, %p137
      %p139 = scmp.ne.s32.totalorder %s127, %s128
      %p140 = scmp.eq.s32.totalorder %s20, 5
      %p141 = por %p139, %p140
      %p143 = scmp.ne.s32.totalorder %s128, %s142
      %p144 = scmp.eq.s32.totalorder %s20, 0
      %p145 = por %p143, %p144
      %s146 = ssub.s32 %s21, %s33
      %s147 = ssub.s32 %s22, %s29
      %s148 = sor.u32 %s146, %s147
      %p149 = scmp.eq.s32.totalorder %s148, 0
      %s151 = sadd.s32 %s150, 1
      %s152 = scalar_select %p149, %s150, %s151
      %p155 = pneg %p149
      %p156 = scmp.eq.s32.totalorder %s14, 5
      %p157 = por %p155, %p156
      %p158 = scmp.ne.s32.totalorder %s150, %s153
      %p159 = scmp.eq.s32.totalorder %s14, 0
      %p160 = por %p158, %p159
      %p161 = scmp.ne.s32.totalorder %s150, %s153
      %p162 = scmp.eq.s32.totalorder %s19, 5
      %p163 = por %p161, %p162
      %p164 = scmp.ne.s32.totalorder %s153, %s154
      %p165 = scmp.eq.s32.totalorder %s19, 0
      %p166 = por %p164, %p165
      %p167 = scmp.ne.s32.totalorder %s153, %s154
      %p168 = scmp.eq.s32.totalorder %s20, 5
      %p169 = por %p167, %p168
      %p171 = scmp.ne.s32.totalorder %s154, %s170
      %p172 = scmp.eq.s32.totalorder %s20, 0
      %p173 = por %p171, %p172
      %p174 = scmp.le.s32.totalorder 1, %s14
      %p175 = scmp.lt.s32.totalorder %s14, 7
      %p176 = pnand %p174, %p175
      %p177 = pneg %p176
      // Predicated region
      $region9: #{tpu_custom_call.1} parent=5 // pred_check
        _
      $region10: #{tpu_custom_call.1} parent=5 // pred_check_branch
        %179 = sbr.rel (%p176) target = $region12
      $region11: #{tpu_custom_call.1} parent=5 // pred_region
        %s180 = ssub.s32 %s14, 1
        // Predicated region
        $region13: #{tpu_custom_call.1} parent=11 // pred_check
          %p181 = pneg %p75
        $region14: #{tpu_custom_call.1} parent=11 // pred_check_branch
          %183 = sbr.rel (%p181) target = $region16
        $region15: #{tpu_custom_call.1} parent=11 // pred_region
          _
        $region16: #{tpu_custom_call.1} parent=11 // pred_fallthru
          _
        // Predicated region
        $region17: #{tpu_custom_call.1} parent=11 // pred_check
          %p184 = pneg %p96
        $region18: #{tpu_custom_call.1} parent=11 // pred_check_branch
          %186 = sbr.rel (%p184) target = $region20
        $region19: #{tpu_custom_call.1} parent=11 // pred_region
          _
        $region20: #{tpu_custom_call.1} parent=11 // pred_fallthru
          _
        // Predicated region
        $region21: #{tpu_custom_call.1} parent=11 // pred_check
          %p187 = pneg %p117
        $region22: #{tpu_custom_call.1} parent=11 // pred_check_branch
          %189 = sbr.rel (%p187) target = $region24
        $region23: #{tpu_custom_call.1} parent=11 // pred_region
          _
        $region24: #{tpu_custom_call.1} parent=11 // pred_fallthru
          _
        // Predicated region
        $region25: #{tpu_custom_call.1} parent=11 // pred_check
          %p190 = pneg %p138
        $region26: #{tpu_custom_call.1} parent=11 // pred_check_branch
          %192 = sbr.rel (%p190) target = $region28
        $region27: #{tpu_custom_call.1} parent=11 // pred_region
          _
        $region28: #{tpu_custom_call.1} parent=11 // pred_fallthru
          _
      $region12: #{tpu_custom_call.1} parent=5 // pred_fallthru
        _
      %p193 = scmp.lt.s32.totalorder %s14, 6
      // Predicated region
      $region29: #{tpu_custom_call.1} parent=5 // pred_check
        %p194 = pneg %p193
      $region30: #{tpu_custom_call.1} parent=5 // pred_check_branch
        %196 = sbr.rel (%p194) target = $region32
      $region31: #{tpu_custom_call.1} parent=5 // pred_region
        // Predicated region
        $region33: #{tpu_custom_call.1} parent=31 // pred_check
          %p197 = pneg %p48
        $region34: #{tpu_custom_call.1} parent=31 // pred_check_branch
          %199 = sbr.rel (%p197) target = $region36
        $region35: #{tpu_custom_call.1} parent=31 // pred_region
          %p200 = scmp.lt.s32.totalorder %s21, 1
          %s201 = scalar_select %p200, %s21, 1
          %p202 = scmp.lt.s32.totalorder %s22, 2
          %s203 = scalar_select %p202, %s22, 2
          %s204 = smul.addr %s201, 3
          %s205 = sadd.s32 %s203, %s204
          %s206 = smul.addr %s205, 8
          %s207 = scalar_lea.vmem %s0, %s206
        $region36: #{tpu_custom_call.1} parent=31 // pred_fallthru
          _
      $region32: #{tpu_custom_call.1} parent=5 // pred_fallthru
        _
      %p208 = scmp.le.s32.totalorder 1, %s14
      %p209 = scmp.lt.s32.totalorder %s14, 7
      %p210 = pnand %p208, %p209
      %p211 = pneg %p210
      // Predicated region
      $region37: #{tpu_custom_call.1} parent=5 // pred_check
        _
      $region38: #{tpu_custom_call.1} parent=5 // pred_check_branch
        %213 = sbr.rel (%p210) target = $region40
      $region39: #{tpu_custom_call.1} parent=5 // pred_region
        %s214 = ssub.s32 %s14, 1
        %p215 = scmp.lt.s32.totalorder %s23, 1
        %s216 = scalar_select %p215, %s23, 1
        %p217 = scmp.lt.s32.totalorder %s24, 2
        %s218 = scalar_select %p217, %s24, 2
        %s219 = smul.addr %s216, 3
        %s220 = sadd.s32 %s218, %s219
        %s221 = smul.addr %s220, 8
        %s222 = scalar_lea.vmem %s0, %s221
        %p223 = pneg %p54
        %p224 = pneg %p51
        %p225 = pneg %p75
        %p226 = pneg %p72
        %p227 = pneg %p96
        %p228 = pneg %p93
        %p229 = pneg %p117
        %p230 = pneg %p114
        %p231 = pneg %p138
        %p232 = pneg %p135
        %p233 = pneg %p166
        %p234 = pneg %p163
        %s235 = sand.u32 %s153, 1
        %s236 = scalar_lea.sflag [#allocation3], %s235
        %s237 = sand.u32 %s153, 1
        %s238 = smul.addr %s237, 8
        %s239 = scalar_lea.vmem [#allocation2], %s238
        %p240 = scmp.lt.s32.totalorder %s23, 1
        %s241 = scalar_select %p240, %s23, 1
        %p242 = scmp.lt.s32.totalorder %s24, 2
        %s243 = scalar_select %p242, %s24, 2
        %s244 = smul.addr %s241, 3
        %s245 = sadd.s32 %s243, %s244
        %s246 = smul.addr %s245, 8
        %s247 = scalar_lea.vmem %s0, %s246
        %v248 = vld [vmem:[%s247] sm:$0xff]
        %v249 = vld [vmem:[%s1] sm:$0xff]
        %v250 = vld [vmem:[%s1 + $0x8] sm:$0xff]
        %v251 = vld [vmem:[%s1 + $0x10] sm:$0xff]
        %v252 = vld [vmem:[%s1 + $0x18] sm:$0xff]
        %v253 = vld [vmem:[%s1 + $0x20] sm:$0xff]
        %v254 = vld [vmem:[%s1 + $0x28] sm:$0xff]
        %v255 = vld [vmem:[%s1 + $0x30] sm:$0xff]
        %v256 = vld [vmem:[%s1 + $0x38] sm:$0xff]
        %v257 = vld [vmem:[%s1 + $0x40] sm:$0xff]
        %v258 = vld [vmem:[%s1 + $0x48] sm:$0xff]
        %v259 = vld [vmem:[%s1 + $0x50] sm:$0xff]
        %v260 = vld [vmem:[%s1 + $0x58] sm:$0xff]
        %v261 = vld [vmem:[%s1 + $0x60] sm:$0xff]
        %v262 = vld [vmem:[%s1 + $0x68] sm:$0xff]
        %v263 = vld [vmem:[%s1 + $0x70] sm:$0xff]
        %v264 = vld [vmem:[%s1 + $0x78] sm:$0xff]
        %vm265 = vcmask 523264
        %v267 = vsel %vm265, %v248, 0
        %269 = vmatpush.msra.mxu0 0.0
        %270 = vmatpush.msra.mxu0 0.0
        %271 = vmatpush.msra.mxu0 0.0
        %272 = vmatpush.msra.mxu0 0.0
        %273 = vmatpush.msra.mxu0 0.0
        %274 = vmatpush.msra.mxu0 0.0
        %275 = vmatpush.msra.mxu0 0.0
        %276 = vmatpush.msra.mxu0 0.0
        %277 = vmatpush.msra.mxu0 %v263
        %278 = vmatpush.msra.mxu0 %v261
        %279 = vmatpush.msra.mxu0 %v259
        %280 = vmatpush.msra.mxu0 %v257
        %281 = vmatpush.msra.mxu0 %v255
        %282 = vmatpush.msra.mxu0 %v253
        %283 = vmatpush.msra.mxu0 %v251
        %284 = vmatpush.msra.mxu0 %v249
        %285 = vmatmul.f32.gmra.mxu0 %v267
        %v286 = vpop.f32.mrf.mxu0
        %v287 = vadd.f32 0.0, %v286
        %288 = vdwg.mxu0
        %289 = vmatpush.msra.mxu0 0.0
        %290 = vmatpush.msra.mxu0 0.0
        %291 = vmatpush.msra.mxu0 0.0
        %292 = vmatpush.msra.mxu0 0.0
        %293 = vmatpush.msra.mxu0 0.0
        %294 = vmatpush.msra.mxu0 0.0
        %295 = vmatpush.msra.mxu0 0.0
        %296 = vmatpush.msra.mxu0 0.0
        %297 = vmatpush.msra.mxu0 %v264
        %298 = vmatpush.msra.mxu0 %v262
        %299 = vmatpush.msra.mxu0 %v260
        %300 = vmatpush.msra.mxu0 %v258
        %301 = vmatpush.msra.mxu0 %v256
        %302 = vmatpush.msra.mxu0 %v254
        %303 = vmatpush.msra.mxu0 %v252
        %304 = vmatpush.msra.mxu0 %v250
        %305 = vmatmul.f32.gmra.mxu0 %v267
        %v306 = vpop.f32.mrf.mxu0
        %v307 = vadd.f32 0.0, %v306
        %308 = vdwg.mxu0
        %v309 = vlaneseq
        %v310 = vand.u32 %v309, 127
        %vm311 = vcmp.eq.s32.totalorder %v310, 0
        %v312 = vld [vmem:[%s4] sm:$0x1]
        %v313 = vld [vmem:[%s4 + $0x1] sm:$0x1]
        %v314 = vsel %vm311, 1, 0
        %vm315 = vcmp.eq.s32.totalorder %v314, 1
        %v316 = vsel %vm315, 0.0, %v307
        %v317 = vmul.f32 %v287, %v287
        %v318 = vmul.f32 %v316, %v316
        %v319 = vadd.f32 %v317, %v318
        %v320 = vmax.f32 %v319, 1.1754944e-38
        %v321 = vrsqrt.pop %v320
        %v322 = vmul.f32 %v321, %v320
        %v323 = vmul.f32 %v322, %v321
        %v324 = vmul.f32 0.5, %v323
        %v325 = vsub.f32 1.5, %v324
        %v326 = vmul.f32 %v321, %v325
        %vm327 = vweird.f32 %v320
        %vm328 = vweird.f32 %v321
        %vm329 = vmor %vm327, %vm328
        %v330 = vsel %vm329, %v321, %v326
        %v331 = vmul.f32 %v319, %v330
        %v333 = vperm.slane %v312, 0
        %v335 = vsub.f32 %v331, %v333
        %v336 = vmax.f32 %v335, 0.0
        %v337 = vmul.f32 %v336, %v330
        %v338 = vmul.f32 %v307, %v307
        %v339 = vmax.f32 %v338, 1.1754944e-38
        %v340 = vrsqrt.pop %v339
        %v341 = vmul.f32 %v340, %v339
        %v342 = vmul.f32 %v341, %v340
        %v343 = vmul.f32 0.5, %v342
        %v344 = vsub.f32 1.5, %v343
        %v345 = vmul.f32 %v340, %v344
        %vm346 = vweird.f32 %v339
        %vm347 = vweird.f32 %v340
        %vm348 = vmor %vm346, %vm347
        %v349 = vsel %vm348, %v340, %v345
        %v350 = vmul.f32 %v338, %v349
        %v352 = vperm.slane %v313, 0
        %v354 = vsub.f32 %v350, %v352
        %v355 = vmax.f32 %v354, 0.0
        %v356 = vmul.f32 %v355, %v349
        %v357 = vmul.f32 %v287, %v337
        %359 = vset.pattern.permute.xlu0 0
        %360 = vperm.xlu0 %359, %v356
        %v361 = vpop.permute.xlu0 %360
        %v363 = vmul.f32 %v307, %v361
        %v364 = vmul.f32 %v307, %v337
        %v365 = vsel %vm315, %v363, %v364
        %v366 = vld [vmem:[%s2] sm:$0xff]
        %v367 = vld [vmem:[%s2 + $0x8] sm:$0xff]
        %v368 = vld [vmem:[%s2 + $0x10] sm:$0xff]
        %v369 = vld [vmem:[%s2 + $0x18] sm:$0xff]
        %v370 = vld [vmem:[%s2 + $0x20] sm:$0xff]
        %v371 = vld [vmem:[%s2 + $0x28] sm:$0xff]
        %v372 = vld [vmem:[%s2 + $0x30] sm:$0xff]
        %v373 = vld [vmem:[%s2 + $0x38] sm:$0xff]
        %v374 = vld [vmem:[%s2 + $0x40] sm:$0xff]
        %v375 = vld [vmem:[%s2 + $0x48] sm:$0xff]
        %v376 = vld [vmem:[%s2 + $0x50] sm:$0xff]
        %v377 = vld [vmem:[%s2 + $0x58] sm:$0xff]
        %v378 = vld [vmem:[%s2 + $0x60] sm:$0xff]
        %v379 = vld [vmem:[%s2 + $0x68] sm:$0xff]
        %v380 = vld [vmem:[%s2 + $0x70] sm:$0xff]
        %v381 = vld [vmem:[%s2 + $0x78] sm:$0xff]
        %v382 = vld [vmem:[%s3] sm:$0xff]
        %v383 = vld [vmem:[%s3 + $0x8] sm:$0xff]
        %v384 = vld [vmem:[%s3 + $0x10] sm:$0xff]
        %v385 = vld [vmem:[%s3 + $0x18] sm:$0xff]
        %v386 = vld [vmem:[%s3 + $0x20] sm:$0xff]
        %v387 = vld [vmem:[%s3 + $0x28] sm:$0xff]
        %v388 = vld [vmem:[%s3 + $0x30] sm:$0xff]
        %v389 = vld [vmem:[%s3 + $0x38] sm:$0xff]
        %v390 = vld [vmem:[%s3 + $0x40] sm:$0xff]
        %v391 = vld [vmem:[%s3 + $0x48] sm:$0xff]
        %v392 = vld [vmem:[%s3 + $0x50] sm:$0xff]
        %v393 = vld [vmem:[%s3 + $0x58] sm:$0xff]
        %v394 = vld [vmem:[%s3 + $0x60] sm:$0xff]
        %v395 = vld [vmem:[%s3 + $0x68] sm:$0xff]
        %v396 = vld [vmem:[%s3 + $0x70] sm:$0xff]
        %v397 = vld [vmem:[%s3 + $0x78] sm:$0xff]
        %398 = vmatpush.msra.mxu0 %v397
        %399 = vmatpush.msra.mxu0 %v396
        %400 = vmatpush.msra.mxu0 %v395
        %401 = vmatpush.msra.mxu0 %v394
        %402 = vmatpush.msra.mxu0 %v393
        %403 = vmatpush.msra.mxu0 %v392
        %404 = vmatpush.msra.mxu0 %v391
        %405 = vmatpush.msra.mxu0 %v390
        %406 = vmatpush.msra.mxu0 %v389
        %407 = vmatpush.msra.mxu0 %v388
        %408 = vmatpush.msra.mxu0 %v387
        %409 = vmatpush.msra.mxu0 %v386
        %410 = vmatpush.msra.mxu0 %v385
        %411 = vmatpush.msra.mxu0 %v384
        %412 = vmatpush.msra.mxu0 %v383
        %413 = vmatpush.msra.mxu0 %v382
        %414 = vmatmul.f32.gmra.mxu0 %v365
        %v415 = vpop.f32.mrf.mxu0
        %v416 = vadd.f32 0.0, %v415
        %417 = vdwg.mxu0
        %418 = vmatpush.msra.mxu0 %v381
        %419 = vmatpush.msra.mxu0 %v380
        %420 = vmatpush.msra.mxu0 %v379
        %421 = vmatpush.msra.mxu0 %v378
        %422 = vmatpush.msra.mxu0 %v377
        %423 = vmatpush.msra.mxu0 %v376
        %424 = vmatpush.msra.mxu0 %v375
        %425 = vmatpush.msra.mxu0 %v374
        %426 = vmatpush.msra.mxu0 %v373
        %427 = vmatpush.msra.mxu0 %v372
        %428 = vmatpush.msra.mxu0 %v371
        %429 = vmatpush.msra.mxu0 %v370
        %430 = vmatpush.msra.mxu0 %v369
        %431 = vmatpush.msra.mxu0 %v368
        %432 = vmatpush.msra.mxu0 %v367
        %433 = vmatpush.msra.mxu0 %v366
        %434 = vmatmul.f32.gmra.mxu0 %v357
        %v435 = vpop.f32.mrf.mxu0
        %v436 = vadd.f32 %v416, %v435
        %437 = vdwg.mxu0
        %438 = vst.msk [vmem:[%s239] sm:$0xff] %vm265, %v436
        %s439 = sand.u32 %s153, 1
        %s440 = scalar_lea.sflag [#allocation3], %s439
        %s441 = sand.u32 %s153, 1
        %s442 = smul.addr %s441, 8
        %s443 = scalar_lea.vmem [#allocation2], %s442
        // Predicated region
        $region41: #{tpu_custom_call.1} parent=39 // pred_check
          %p444 = pneg %p163
        $region42: #{tpu_custom_call.1} parent=39 // pred_check_branch
          %446 = sbr.rel (%p444) target = $region44
        $region43: #{tpu_custom_call.1} parent=39 // pred_region
          %448 = vsyncadd %s440, 0
          %s449 = smul.addr %s23, 3
          %s450 = sadd.s32 %s24, %s449
          %s451 = smul.addr %s450, 8
          %s452 = scalar_lea.hbm %s5, %s451
          %s454 = sshll.u32 %s443, 4
          %s455 = int_to_ptr.vmem [resolvable:$true] %s454
          %s456 = sshll.u32 %s452, 4
          %s457 = int_to_ptr.hbm [resolvable:$true] %s456
          %459 = dma.vmem_to_hbm [thread:$0]  %s455, 128, %s457, %s440
        $region44: #{tpu_custom_call.1} parent=39 // pred_fallthru
          _
      $region40: #{tpu_custom_call.1} parent=5 // pred_fallthru
        _
      %p460 = scmp.le.s32.totalorder 2, %s14
      // Predicated region
      $region45: #{tpu_custom_call.1} parent=5 // pred_check
        %p461 = pneg %p460
      $region46: #{tpu_custom_call.1} parent=5 // pred_check_branch
        %463 = sbr.rel (%p461) target = $region48
      $region47: #{tpu_custom_call.1} parent=5 // pred_region
        %s464 = ssub.s32 %s14, 2
        // Predicated region
        $region49: #{tpu_custom_call.1} parent=47 // pred_check
          %p465 = pneg %p169
        $region50: #{tpu_custom_call.1} parent=47 // pred_check_branch
          %467 = sbr.rel (%p465) target = $region52
        $region51: #{tpu_custom_call.1} parent=47 // pred_region
          %s468 = sand.u32 %s154, 1
          %s469 = scalar_lea.sflag [#allocation3], %s468
          %s470 = sand.u32 %s154, 1
          %s471 = smul.addr %s470, 8
          %s472 = scalar_lea.vmem [#allocation2], %s471
          %474 = dma.done %s469, 128
        $region52: #{tpu_custom_call.1} parent=47 // pred_fallthru
          _
      $region48: #{tpu_custom_call.1} parent=5 // pred_fallthru
        _
    $region6: #{tpu_custom_call.1} parent=1 // loop_footer
      %s18 = sadd.s32 1, %s14
    $region7: #{tpu_custom_call.1} parent=1 // loop_footer_branch
      %13 = sbr.rel target = $region3
    $region8: #{tpu_custom_call.1} parent=1 // loop_exit
      _
    %475 = vsyncpa [#allocation3], 1
    %s476 = scalar_lea.sflag [#allocation3], 1
    %477 = vsyncpa %s476, 1

</llo_original>
